<compile_context>
chip_gen: v7x
topology: tpu7x:2x2x1
jax: 0.10.0
libtpu: 0.0.40
codegen_flags: <defaults>
</compile_context>

<pallas_src>
import jax
import jax.numpy as jnp
from jax.experimental import pallas as pl
from jax.experimental.pallas import tpu as pltpu

SMOOTH = 1e-05


def dice_loss_kernel(predict_ref, target_ref, out_ref, inter_acc, union_acc):
    # Grid: axis 0 = batch element ("parallel"), axis 1 = spatial tile
    # ("arbitrary" reduction axis).
    s = pl.program_id(1)

    @pl.when(s == 0)
    def _():
        inter_acc[...] = jnp.zeros_like(inter_acc)
        union_acc[...] = jnp.zeros_like(union_acc)

    C = predict_ref.shape[1]                               # static
    t = target_ref[0].astype(jnp.float32)                  # (s_blk, 128)
    x1 = predict_ref[0, 1].astype(jnp.float32)             # channel-1 logits

    # Max-free softmax channel-1 prob: p1 = 1 / sum_c exp(x_c - x_1).
    # exp(0) == 1 covers channel 1 itself, so only C-1 exps (EUP) + C-1 adds
    # (VPU) per slab. Overflow on extreme logits saturates p1 to 0 (benign).
    denom = jnp.ones_like(x1)
    for c in range(C):
        if c == 1:
            continue
        denom = denom + jnp.exp(predict_ref[0, c].astype(jnp.float32) - x1)

    # EUP approximate reciprocal + one Newton step -> ~full f32 precision
    # without a VPU divide.
    r = pl.reciprocal(denom, approx=True)
    p1 = r * (2.0 - denom * r)

    # Pure element-wise accumulation every step; no per-step reductions.
    inter_acc[...] += p1 * t
    union_acc[...] += p1 + t

    @pl.when(s == pl.num_programs(1) - 1)
    def _():
        inter = jnp.sum(inter_acc[...])
        union = jnp.sum(union_acc[...])
        dice = (2.0 * inter + SMOOTH) / (union + SMOOTH)
        # Lane-dense (1, 8, 128) output block; wrapper reads [b, 0, 0].
        out_ref[...] = jnp.full(out_ref.shape, 1.0 - dice, dtype=out_ref.dtype)


def _pick_sublane_block(S, C, max_sublanes, budget_bytes):
    """Largest legal sublane block: divisor of S, multiple of 8 (or == S),
    sized so double-buffered inputs + accumulators fit the VMEM budget."""
    # Per sublane row (128 f32 lanes): 2x double-buffered (predict C rows +
    # target 1 row) + 2 resident accumulator rows.
    bytes_per_row = 4 * 128 * (2 * (C + 1) + 2)
    max_rows = max(1, min(max_sublanes, budget_bytes // bytes_per_row))
    if S <= max_rows:
        return S                      # whole spatial extent in one tile
    for d in range(max_rows, 0, -1):
        if S % d == 0 and d % 8 == 0:
            return d
    # No multiple-of-8 divisor fits the budget; full extent is always legal.
    return S


def dice_loss(predict, target, *, max_sublanes=1024, vmem_budget_bytes=10 << 20):
    """predict: (N, C, H, W) float, target: (N, H, W) int. Returns (N,) float32."""
    N, C, H, W = predict.shape
    assert C >= 2, "DiceLoss uses softmax channel 1; need C >= 2"
    HW = H * W
    # TODO(synk): support H*W not a multiple of 128 via in-kernel lane masking.
    assert HW % 128 == 0, "H*W must be a multiple of 128"
    S = HW // 128

    s_blk = _pick_sublane_block(S, C, max_sublanes, vmem_budget_bytes)

    p = predict.reshape(N, C, S, 128)
    t = target.reshape(N, S, 128)
    grid = (N, S // s_blk)

    out = pl.pallas_call(
        dice_loss_kernel,
        out_shape=jax.ShapeDtypeStruct((N, 8, 128), jnp.float32),
        grid_spec=pltpu.PrefetchScalarGridSpec(
            num_scalar_prefetch=0,
            grid=grid,
            in_specs=[
                pl.BlockSpec((1, C, s_blk, 128), lambda b, s: (b, 0, s, 0)),
                pl.BlockSpec((1, s_blk, 128), lambda b, s: (b, s, 0)),
            ],
            out_specs=pl.BlockSpec((1, 8, 128), lambda b, s: (b, 0, 0)),
            scratch_shapes=[
                pltpu.VMEM((s_blk, 128), jnp.float32),   # intersection partials
                pltpu.VMEM((s_blk, 128), jnp.float32),   # union partials
            ],
        ),
        compiler_params=pltpu.CompilerParams(
            dimension_semantics=("parallel", "arbitrary"),
        ),
        cost_estimate=pl.CostEstimate(
            flops=8 * N * C * HW,
            transcendentals=N * (C - 1) * HW,
            bytes_accessed=(N * C + N) * HW * 4 + N * 8 * 128 * 4,
        ),
    )(p, t)
    return out[:, 0, 0]


def dice_loss_ref(predict, target):
    N, C, H, W = predict.shape
    p = jax.nn.softmax(predict.reshape(N, C, -1), axis=1)[:, 1, :]
    t = target.reshape(N, -1).astype(jnp.float32)
    inter = jnp.sum(p * t, axis=1)
    union = jnp.sum(p + t, axis=1)
    return 1.0 - (2.0 * inter + SMOOTH) / (union + SMOOTH)


if __name__ == "__main__":
    key = jax.random.PRNGKey(0)
    k1, k2 = jax.random.split(key)

    N, C, H, W = 2, 4, 16, 16
    predict = jax.random.normal(k1, (N, C, H, W), dtype=jnp.float32)
    # PyTorch target is int64; JAX default has x64 disabled, so int32 (values 0/1).
    target = jax.random.randint(k2, (N, H, W), 0, 2, dtype=jnp.int32)

    out = jax.block_until_ready(dice_loss(predict, target))
    ref = dice_loss_ref(predict, target)

    assert out.shape == (N,)
    # Slightly looser than 1e-5: approx-reciprocal + Newton and the max-free
    # softmax reformulation perturb numerics at the ~1e-6..1e-5 level.
    assert jnp.allclose(out, ref, atol=1e-4, rtol=1e-4), (out, ref)

    print("KERNEL_OK")
</pallas_src>

<mosaic_0001>
module attributes {stable_mosaic.version = 11 : i64} {
  func.func @dice_loss_kernel(%arg0: i32, %arg1: i32, %arg2: memref<1x4x2x128xf32, #tpu.memory_space<vmem>>, %arg3: memref<1x2x128xi32, #tpu.memory_space<vmem>>, %arg4: memref<1x8x128xf32, #tpu.memory_space<vmem>>, %arg5: memref<2x128xf32, #tpu.memory_space<vmem>>, %arg6: memref<2x128xf32, #tpu.memory_space<vmem>>) attributes {dimension_semantics = [#tpu.dimension_semantics<parallel>, #tpu.dimension_semantics<arbitrary>], iteration_bounds = array<i64: 2, 1>, scalar_prefetch = 0 : i64, scratch_operands = 2 : i64, tpu.core_type = #tpu.core_type<tc>, window_params = [{transform_indices = @transform_0, window_bounds = array<i64: 1, 4, 2, 128>}, {transform_indices = @transform_1, window_bounds = array<i64: 1, 2, 128>}, {transform_indices = @transform_2, window_bounds = array<i64: 1, 8, 128>}]} {
    %c0_i32 = arith.constant 0 : i32
    %0 = arith.cmpi eq, %arg1, %c0_i32 : i32
    %1 = arith.extui %0 : i1 to i32
    %c0_i32_0 = arith.constant 0 : i32
    %2 = arith.cmpi ne, %1, %c0_i32_0 : i32
    scf.if %2 {
      %cst_27 = arith.constant 0.000000e+00 : f32
      %40 = vector.broadcast %cst_27 : f32 to vector<2x128xf32>
      %c0_28 = arith.constant 0 : index
      %c0_29 = arith.constant 0 : index
      %41 = vector.load %arg5[%c0_28, %c0_29] : memref<2x128xf32, #tpu.memory_space<vmem>>, vector<2x128xf32>
      tpu.vector_store %arg5[%c0_28, %c0_29], %40 {strides = array<i32>} : memref<2x128xf32, #tpu.memory_space<vmem>>, vector<2x128xf32>,
      %cst_30 = arith.constant 0.000000e+00 : f32
      %42 = vector.broadcast %cst_30 : f32 to vector<2x128xf32>
      %c0_31 = arith.constant 0 : index
      %c0_32 = arith.constant 0 : index
      %43 = vector.load %arg6[%c0_31, %c0_32] : memref<2x128xf32, #tpu.memory_space<vmem>>, vector<2x128xf32>
      tpu.vector_store %arg6[%c0_31, %c0_32], %42 {strides = array<i32>} : memref<2x128xf32, #tpu.memory_space<vmem>>, vector<2x128xf32>,
    } else {
    }
    %c0 = arith.constant 0 : index
    %c0_1 = arith.constant 0 : index
    %c0_2 = arith.constant 0 : index
    %3 = vector.load %arg3[%c0, %c0_1, %c0_2] : memref<1x2x128xi32, #tpu.memory_space<vmem>>, vector<1x2x128xi32>
    %4 = vector.shape_cast %3 : vector<1x2x128xi32> to vector<2x128xi32>
    %5 = arith.sitofp %4 : vector<2x128xi32> to vector<2x128xf32>
    %c0_3 = arith.constant 0 : index
    %c1 = arith.constant 1 : index
    %c0_4 = arith.constant 0 : index
    %c0_5 = arith.constant 0 : index
    %6 = vector.load %arg2[%c0_3, %c1, %c0_4, %c0_5] : memref<1x4x2x128xf32, #tpu.memory_space<vmem>>, vector<1x1x2x128xf32>
    %7 = vector.shape_cast %6 : vector<1x1x2x128xf32> to vector<2x128xf32>
    %cst = arith.constant 1.000000e+00 : f32
    %8 = vector.broadcast %cst : f32 to vector<2x128xf32>
    %c0_6 = arith.constant 0 : index
    %c0_7 = arith.constant 0 : index
    %c0_8 = arith.constant 0 : index
    %c0_9 = arith.constant 0 : index
    %9 = vector.load %arg2[%c0_6, %c0_7, %c0_8, %c0_9] : memref<1x4x2x128xf32, #tpu.memory_space<vmem>>, vector<1x1x2x128xf32>
    %10 = vector.shape_cast %9 : vector<1x1x2x128xf32> to vector<2x128xf32>
    %11 = arith.subf %10, %7 : vector<2x128xf32>
    %12 = math.exp %11 : vector<2x128xf32>
    %13 = arith.addf %8, %12 : vector<2x128xf32>
    %c0_10 = arith.constant 0 : index
    %c2 = arith.constant 2 : index
    %c0_11 = arith.constant 0 : index
    %c0_12 = arith.constant 0 : index
    %14 = vector.load %arg2[%c0_10, %c2, %c0_11, %c0_12] : memref<1x4x2x128xf32, #tpu.memory_space<vmem>>, vector<1x1x2x128xf32>
    %15 = vector.shape_cast %14 : vector<1x1x2x128xf32> to vector<2x128xf32>
    %16 = arith.subf %15, %7 : vector<2x128xf32>
    %17 = math.exp %16 : vector<2x128xf32>
    %18 = arith.addf %13, %17 : vector<2x128xf32>
    %c0_13 = arith.constant 0 : index
    %c3 = arith.constant 3 : index
    %c0_14 = arith.constant 0 : index
    %c0_15 = arith.constant 0 : index
    %19 = vector.load %arg2[%c0_13, %c3, %c0_14, %c0_15] : memref<1x4x2x128xf32, #tpu.memory_space<vmem>>, vector<1x1x2x128xf32>
    %20 = vector.shape_cast %19 : vector<1x1x2x128xf32> to vector<2x128xf32>
    %21 = arith.subf %20, %7 : vector<2x128xf32>
    %22 = math.exp %21 : vector<2x128xf32>
    %23 = arith.addf %18, %22 : vector<2x128xf32>
    %24 = tpu.reciprocal %23 {approx = true} : vector<2x128xf32> -> vector<2x128xf32>
    %25 = arith.mulf %23, %24 : vector<2x128xf32>
    %cst_16 = arith.constant 2.000000e+00 : f32
    %26 = vector.broadcast %cst_16 : f32 to vector<2x128xf32>
    %27 = arith.subf %26, %25 : vector<2x128xf32>
    %28 = arith.mulf %24, %27 : vector<2x128xf32>
    %c0_17 = arith.constant 0 : index
    %c0_18 = arith.constant 0 : index
    %29 = vector.load %arg5[%c0_17, %c0_18] : memref<2x128xf32, #tpu.memory_space<vmem>>, vector<2x128xf32>
    %30 = arith.mulf %28, %5 : vector<2x128xf32>
    %31 = arith.addf %29, %30 : vector<2x128xf32>
    %c0_19 = arith.constant 0 : index
    %c0_20 = arith.constant 0 : index
    %32 = vector.load %arg5[%c0_19, %c0_20] : memref<2x128xf32, #tpu.memory_space<vmem>>, vector<2x128xf32>
    tpu.vector_store %arg5[%c0_19, %c0_20], %31 {strides = array<i32>} : memref<2x128xf32, #tpu.memory_space<vmem>>, vector<2x128xf32>,
    %c0_21 = arith.constant 0 : index
    %c0_22 = arith.constant 0 : index
    %33 = vector.load %arg6[%c0_21, %c0_22] : memref<2x128xf32, #tpu.memory_space<vmem>>, vector<2x128xf32>
    %34 = arith.addf %28, %5 : vector<2x128xf32>
    %35 = arith.addf %33, %34 : vector<2x128xf32>
    %c0_23 = arith.constant 0 : index
    %c0_24 = arith.constant 0 : index
    %36 = vector.load %arg6[%c0_23, %c0_24] : memref<2x128xf32, #tpu.memory_space<vmem>>, vector<2x128xf32>
    tpu.vector_store %arg6[%c0_23, %c0_24], %35 {strides = array<i32>} : memref<2x128xf32, #tpu.memory_space<vmem>>, vector<2x128xf32>,
    %c0_i32_25 = arith.constant 0 : i32
    %37 = arith.cmpi eq, %arg1, %c0_i32_25 : i32
    %38 = arith.extui %37 : i1 to i32
    %c0_i32_26 = arith.constant 0 : i32
    %39 = arith.cmpi ne, %38, %c0_i32_26 : i32
    scf.if %39 {
      %c0_27 = arith.constant 0 : index
      %c0_28 = arith.constant 0 : index
      %40 = vector.load %arg5[%c0_27, %c0_28] : memref<2x128xf32, #tpu.memory_space<vmem>>, vector<2x128xf32>
      %41 = vector.shape_cast %40 : vector<2x128xf32> to vector<1x2x128xf32>
      %cst_29 = arith.constant dense<0.000000e+00> : vector<1xf32>
      %42 = vector.multi_reduction <add>, %41, %cst_29 [1, 2] : vector<1x2x128xf32> to vector<1xf32>
      %43 = vector.shape_cast %42 : vector<1xf32> to vector<1x1x1xf32>
      %44 = vector.extract %43[0, 0, 0] : f32 from vector<1x1x1xf32>
      %c0_30 = arith.constant 0 : index
      %c0_31 = arith.constant 0 : index
      %45 = vector.load %arg6[%c0_30, %c0_31] : memref<2x128xf32, #tpu.memory_space<vmem>>, vector<2x128xf32>
      %46 = vector.shape_cast %45 : vector<2x128xf32> to vector<1x2x128xf32>
      %cst_32 = arith.constant dense<0.000000e+00> : vector<1xf32>
      %47 = vector.multi_reduction <add>, %46, %cst_32 [1, 2] : vector<1x2x128xf32> to vector<1xf32>
      %48 = vector.shape_cast %47 : vector<1xf32> to vector<1x1x1xf32>
      %49 = vector.extract %48[0, 0, 0] : f32 from vector<1x1x1xf32>
      %cst_33 = arith.constant 2.000000e+00 : f32
      %50 = arith.mulf %cst_33, %44 : f32
      %cst_34 = arith.constant 9.99999974E-6 : f32
      %51 = arith.addf %50, %cst_34 : f32
      %cst_35 = arith.constant 9.99999974E-6 : f32
      %52 = arith.addf %49, %cst_35 : f32
      %53 = arith.divf %51, %52 : f32
      %cst_36 = arith.constant 1.000000e+00 : f32
      %54 = arith.subf %cst_36, %53 : f32
      %55 = vector.broadcast %54 : f32 to vector<1x8x128xf32>
      %c0_37 = arith.constant 0 : index
      %c0_38 = arith.constant 0 : index
      %c0_39 = arith.constant 0 : index
      %56 = vector.load %arg4[%c0_37, %c0_38, %c0_39] : memref<1x8x128xf32, #tpu.memory_space<vmem>>, vector<1x8x128xf32>
      tpu.vector_store %arg4[%c0_37, %c0_38, %c0_39], %55 {strides = array<i32>} : memref<1x8x128xf32, #tpu.memory_space<vmem>>, vector<1x8x128xf32>,
    } else {
    }
    return
  }
  func.func @transform_0(%arg0: i32, %arg1: i32) -> (i32, i32, i32, i32) {
    %c0_i32 = arith.constant 0 : i32
    %c0_i32_0 = arith.constant 0 : i32
    %c0_i32_1 = arith.constant 0 : i32
    return %arg0, %c0_i32, %arg1, %c0_i32_0 : i32, i32, i32, i32
  }
  func.func @transform_1(%arg0: i32, %arg1: i32) -> (i32, i32, i32) {
    %c0_i32 = arith.constant 0 : i32
    %c0_i32_0 = arith.constant 0 : i32
    return %arg0, %arg1, %c0_i32 : i32, i32, i32
  }
  func.func @transform_2(%arg0: i32, %arg1: i32) -> (i32, i32, i32) {
    %c0_i32 = arith.constant 0 : i32
    %c0_i32_0 = arith.constant 0 : i32
    %c0_i32_1 = arith.constant 0 : i32
    return %arg0, %c0_i32, %c0_i32_0 : i32, i32, i32
  }
}

</mosaic_0001>

<llo_original>
// kernel: tpu_custom_call.1
$region0: #{tpu_custom_call.1}
  #allocation0 [shape = 'u32[]', space=smem, size = 0x4, offset = 0x4, fixed_abs, tag = 'smem constant byte address 0x4 - core index']
  #allocation1 [shape = 'u32[144,128]{1,0:T(1,128)}', space=vmem, size = 0x12000, scoped, tag = 'internal scratch']
  #allocation2 [shape = 'f32[2,128]{1,0:T(2,128)}', space=vmem, size = 0x400, scoped, tag = 'scratch operand']
  #allocation3 [shape = 'f32[2,128]{1,0:T(2,128)}', space=vmem, size = 0x400, scoped, tag = 'scratch operand']
  %s0 = inlined_call_operand.hbm [shape: f32[2,4,2,128], index: 0, kind: input, shape index: {}]
  %s1 = inlined_call_operand.hbm [shape: s32[2,2,128], index: 1, kind: input, shape index: {}]
  %s2 = inlined_call_operand.hbm [shape: f32[2,8,128], index: 2, kind: output, shape index: {}]
  %s3 = sld [smem:[#allocation0]]
  $region57: #{tpu_custom_call.1} parent=0
    _
  %s5 = ssub.s32 1, %s3
  %s6 = scalar_select 0, %s5, %s3
  $region1: #{tpu_custom_call.1} parent=0
    #allocation4 [shape = 'u8[8192]{0}', space=vmem, size = 0x2000, scoped, tag = 'input window, operand 0']
    #allocation5 [shape = 's32[2]{0}', space=sflag, size = 0x8, scoped, tag = 'scoped memory for tpu_custom_call.1']
    #allocation6 [shape = 's32[2]{0}', space=sflag, size = 0x8, scoped, tag = 'scoped memory for tpu_custom_call.1']
    #allocation7 [shape = 'u8[2048]{0}', space=vmem, size = 0x800, scoped, tag = 'input window, operand 1']
    #allocation8 [shape = 's32[2]{0}', space=sflag, size = 0x8, scoped, tag = 'scoped memory for tpu_custom_call.1']
    #allocation9 [shape = 'u8[8192]{0}', space=vmem, size = 0x2000, scoped, tag = 'output window, operand 0']
    %7 = vsyncpa [#allocation5], 0
    %s8 = scalar_lea.sflag [#allocation5], 1
    %9 = vsyncpa %s8, 0
    %10 = vsyncpa [#allocation8], 0
    %s11 = scalar_lea.sflag [#allocation8], 1
    %12 = vsyncpa %s11, 0
    %13 = vsyncpa [#allocation6], 0
    %s14 = scalar_lea.sflag [#allocation6], 1
    %15 = vsyncpa %s14, 0
    loop: start=0, step=1, limit=4
    $region2: #{tpu_custom_call.1} parent=1 // loop_pre_header
      _
    $region3: #{tpu_custom_call.1} parent=1 // loop_header
      %s17 = sphi 0, %s21
      %p18 = scmp.ge.s32.totalorder %s17, 4
      %s24 = sphi 0, %s36
      %s25 = sphi 0, %s32
      %s26 = sphi 0, %s24
      %s27 = sphi 0, %s25
      %s28 = sphi 0, %s26
      %s29 = sphi 0, %s27
      %s41 = sphi 0, %s43
      %s44 = sphi 0, %s41
      %s45 = sphi 0, %s44
      %s61 = sphi 0, %s45
      %s69 = sphi 0, %s71
      %s72 = sphi 0, %s69
      %s73 = sphi 0, %s72
      %s89 = sphi 0, %s73
      %s95 = sphi 0, %s97
      %s98 = sphi 0, %s95
      %s99 = sphi 0, %s98
      %s115 = sphi 0, %s99
    $region4: #{tpu_custom_call.1} parent=1 // loop_header_branch
      %20 = sbr.rel (%p18) target = $region8
    $region5: #{tpu_custom_call.1} parent=1 // loop_body
      %s22 = ssub.s32 %s17, 1
      %s23 = ssub.s32 %s17, 2
      %s30 = sadd.s32 1, %s25
      %p31 = scmp.ge.s32.totalorder %s30, 1
      %s32 = scalar_select %p31, 0, %s30
      %s33 = sadd.s32 1, %s24
      %s34 = scalar_select %p31, %s33, %s24
      %p35 = scmp.ge.s32.totalorder %s34, 2
      %s36 = scalar_select %p35, 0, %s34
      %s37 = ssub.s32 %s24, %s36
      %s38 = ssub.s32 %s25, %s32
      %s39 = sor.u32 %s37, %s38
      %p40 = scmp.eq.s32.totalorder %s39, 0
      %s42 = sadd.s32 %s41, 1
      %s43 = scalar_select %p40, %s41, %s42
      %p46 = pneg %p40
      %p47 = scmp.eq.s32.totalorder %s17, 1
      %p48 = por %p46, %p47
      %p49 = scmp.ne.s32.totalorder %s41, %s44
      %p50 = scmp.eq.s32.totalorder %s17, 0
      %p51 = por %p49, %p50
      %p52 = scmp.ne.s32.totalorder %s41, %s44
      %p53 = scmp.eq.s32.totalorder %s22, 1
      %p54 = por %p52, %p53
      %p55 = scmp.ne.s32.totalorder %s44, %s45
      %p56 = scmp.eq.s32.totalorder %s22, 0
      %p57 = por %p55, %p56
      %p58 = scmp.ne.s32.totalorder %s44, %s45
      %p59 = scmp.eq.s32.totalorder %s23, 1
      %p60 = por %p58, %p59
      %p62 = scmp.ne.s32.totalorder %s45, %s61
      %p63 = scmp.eq.s32.totalorder %s23, 0
      %p64 = por %p62, %p63
      %s65 = ssub.s32 %s24, %s36
      %s66 = ssub.s32 %s25, %s32
      %s67 = sor.u32 %s65, %s66
      %p68 = scmp.eq.s32.totalorder %s67, 0
      %s70 = sadd.s32 %s69, 1
      %s71 = scalar_select %p68, %s69, %s70
      %p74 = pneg %p68
      %p75 = scmp.eq.s32.totalorder %s17, 1
      %p76 = por %p74, %p75
      %p77 = scmp.ne.s32.totalorder %s69, %s72
      %p78 = scmp.eq.s32.totalorder %s17, 0
      %p79 = por %p77, %p78
      %p80 = scmp.ne.s32.totalorder %s69, %s72
      %p81 = scmp.eq.s32.totalorder %s22, 1
      %p82 = por %p80, %p81
      %p83 = scmp.ne.s32.totalorder %s72, %s73
      %p84 = scmp.eq.s32.totalorder %s22, 0
      %p85 = por %p83, %p84
      %p86 = scmp.ne.s32.totalorder %s72, %s73
      %p87 = scmp.eq.s32.totalorder %s23, 1
      %p88 = por %p86, %p87
      %p90 = scmp.ne.s32.totalorder %s73, %s89
      %p91 = scmp.eq.s32.totalorder %s23, 0
      %p92 = por %p90, %p91
      %s93 = ssub.s32 %s24, %s36
      %p94 = scmp.eq.s32.totalorder %s93, 0
      %s96 = sadd.s32 %s95, 1
      %s97 = scalar_select %p94, %s95, %s96
      %p100 = pneg %p94
      %p101 = scmp.eq.s32.totalorder %s17, 1
      %p102 = por %p100, %p101
      %p103 = scmp.ne.s32.totalorder %s95, %s98
      %p104 = scmp.eq.s32.totalorder %s17, 0
      %p105 = por %p103, %p104
      %p106 = scmp.ne.s32.totalorder %s95, %s98
      %p107 = scmp.eq.s32.totalorder %s22, 1
      %p108 = por %p106, %p107
      %p109 = scmp.ne.s32.totalorder %s98, %s99
      %p110 = scmp.eq.s32.totalorder %s22, 0
      %p111 = por %p109, %p110
      %p112 = scmp.ne.s32.totalorder %s98, %s99
      %p113 = scmp.eq.s32.totalorder %s23, 1
      %p114 = por %p112, %p113
      %p116 = scmp.ne.s32.totalorder %s99, %s115
      %p117 = scmp.eq.s32.totalorder %s23, 0
      %p118 = por %p116, %p117
      %p119 = scmp.le.s32.totalorder 1, %s17
      %p120 = scmp.lt.s32.totalorder %s17, 3
      %p121 = pnand %p119, %p120
      %p122 = pneg %p121
      // Predicated region
      $region9: #{tpu_custom_call.1} parent=5 // pred_check
        _
      $region10: #{tpu_custom_call.1} parent=5 // pred_check_branch
        %124 = sbr.rel (%p121) target = $region12
      $region11: #{tpu_custom_call.1} parent=5 // pred_region
        %s125 = ssub.s32 %s17, 1
      $region12: #{tpu_custom_call.1} parent=5 // pred_fallthru
        _
      %p126 = scmp.lt.s32.totalorder %s17, 2
      // Predicated region
      $region13: #{tpu_custom_call.1} parent=5 // pred_check
        %p127 = pneg %p126
      $region14: #{tpu_custom_call.1} parent=5 // pred_check_branch
        %129 = sbr.rel (%p127) target = $region16
      $region15: #{tpu_custom_call.1} parent=5 // pred_region
        // Predicated region
        $region17: #{tpu_custom_call.1} parent=15 // pred_check
          %p130 = pneg %p51
        $region18: #{tpu_custom_call.1} parent=15 // pred_check_branch
          %132 = sbr.rel (%p130) target = $region20
        $region19: #{tpu_custom_call.1} parent=15 // pred_region
          %s133 = sand.u32 %s41, 1
          %s134 = scalar_lea.sflag [#allocation5], %s133
          %s135 = sand.u32 %s41, 1
          %s136 = smul.addr %s135, 8
          %s137 = scalar_lea.vmem [#allocation4], %s136
          %s139 = ssub.s32 128, 128
          %140 = vsyncadd %s134, %s139
          %s141 = smul.addr %s24, 4
          %s142 = sadd.s32 %s25, %s141
          %s143 = smul.addr %s142, 32
          %s144 = scalar_lea.hbm %s0, %s143
          %s145 = sshll.u32 %s137, 4
          %s146 = int_to_ptr.vmem [resolvable:$true] %s145
          %151 = dma.hbm_to_vmem [thread:$0]  %s144, 128, %s146, %s134, 32, 32, 2
        $region20: #{tpu_custom_call.1} parent=15 // pred_fallthru
          _
        // Predicated region
        $region21: #{tpu_custom_call.1} parent=15 // pred_check
          %p152 = pneg %p79
        $region22: #{tpu_custom_call.1} parent=15 // pred_check_branch
          %154 = sbr.rel (%p152) target = $region24
        $region23: #{tpu_custom_call.1} parent=15 // pred_region
          %s155 = sand.u32 %s69, 1
          %s156 = scalar_lea.sflag [#allocation8], %s155
          %s157 = sand.u32 %s69, 1
          %s158 = smul.addr %s157, 2
          %s159 = scalar_lea.vmem [#allocation7], %s158
          %s161 = ssub.s32 32, 32
          %162 = vsyncadd %s156, %s161
          %s163 = sadd.s32 %s25, %s24
          %s164 = smul.addr %s163, 32
          %s165 = scalar_lea.hbm %s1, %s164
          %s167 = sshll.u32 %s159, 4
          %s168 = int_to_ptr.vmem [resolvable:$true] %s167
          %170 = dma.hbm_to_vmem [thread:$0]  %s165, 32, %s168, %s156
        $region24: #{tpu_custom_call.1} parent=15 // pred_fallthru
          _
      $region16: #{tpu_custom_call.1} parent=5 // pred_fallthru
        _
      %p171 = scmp.le.s32.totalorder 1, %s17
      %p172 = scmp.lt.s32.totalorder %s17, 3
      %p173 = pnand %p171, %p172
      %p174 = pneg %p173
      // Predicated region
      $region25: #{tpu_custom_call.1} parent=5 // pred_check
        _
      $region26: #{tpu_custom_call.1} parent=5 // pred_check_branch
        %176 = sbr.rel (%p173) target = $region28
      $region27: #{tpu_custom_call.1} parent=5 // pred_region
        %s177 = ssub.s32 %s17, 1
        %s178 = sand.u32 %s44, 1
        %s179 = scalar_lea.sflag [#allocation5], %s178
        %s180 = sand.u32 %s44, 1
        %s181 = smul.addr %s180, 8
        %s182 = scalar_lea.vmem [#allocation4], %s181
        // Predicated region
        $region29: #{tpu_custom_call.1} parent=27 // pred_check
          %p183 = pneg %p57
        $region30: #{tpu_custom_call.1} parent=27 // pred_check_branch
          %185 = sbr.rel (%p183) target = $region32
        $region31: #{tpu_custom_call.1} parent=27 // pred_region
          %186 = dma.done %s179, 128
        $region32: #{tpu_custom_call.1} parent=27 // pred_fallthru
          _
        %s187 = sand.u32 %s72, 1
        %s188 = scalar_lea.sflag [#allocation8], %s187
        %s189 = sand.u32 %s72, 1
        %s190 = smul.addr %s189, 2
        %s191 = scalar_lea.vmem [#allocation7], %s190
        // Predicated region
        $region33: #{tpu_custom_call.1} parent=27 // pred_check
          %p192 = pneg %p85
        $region34: #{tpu_custom_call.1} parent=27 // pred_check_branch
          %194 = sbr.rel (%p192) target = $region36
        $region35: #{tpu_custom_call.1} parent=27 // pred_region
          %195 = dma.done %s188, 32
        $region36: #{tpu_custom_call.1} parent=27 // pred_fallthru
          _
        %s196 = sand.u32 %s44, 1
        %s197 = scalar_lea.sflag [#allocation5], %s196
        %s198 = sand.u32 %s44, 1
        %s199 = smul.addr %s198, 8
        %s200 = scalar_lea.vmem [#allocation4], %s199
        %p201 = pneg %p57
        %p202 = pneg %p54
        %s203 = sand.u32 %s72, 1
        %s204 = scalar_lea.sflag [#allocation8], %s203
        %s205 = sand.u32 %s72, 1
        %s206 = smul.addr %s205, 2
        %s207 = scalar_lea.vmem [#allocation7], %s206
        %p208 = pneg %p85
        %p209 = pneg %p82
        %p210 = pneg %p111
        %p211 = pneg %p108
        %s212 = sand.u32 %s98, 1
        %s213 = scalar_lea.sflag [#allocation6], %s212
        %s214 = sand.u32 %s98, 1
        %s215 = smul.addr %s214, 8
        %s216 = scalar_lea.vmem [#allocation9], %s215
        %p217 = scmp.eq.s32.totalorder %s27, 0
        // Predicated region
        $region37: #{tpu_custom_call.1} parent=27 // pred_check
          %p218 = pneg %p217
        $region38: #{tpu_custom_call.1} parent=27 // pred_check_branch
          %220 = sbr.rel (%p218) target = $region40
        $region39: #{tpu_custom_call.1} parent=27 // pred_region
          %221 = vst [vmem:[#allocation2] sm:$0x3] 0.0
          %222 = vst [vmem:[#allocation3] sm:$0x3] 0.0
        $region40: #{tpu_custom_call.1} parent=27 // pred_fallthru
          _
        %v223 = vld [vmem:[%s191] sm:$0x3]
        %v224 = vcvt.s32.f32 %v223
        %s225 = scalar_lea.vmem %s182, 2 [#allocation4]
        %v226 = vld [vmem:[%s225] sm:$0x3]
        %v227 = vld [vmem:[%s182] sm:$0x3]
        %v228 = vsub.f32 %v227, %v226
        %v229 = vmul.f32 %v228, 1.442695
        %v230 = vpow.pop %v229
        %v231 = vadd.f32 %v230, 1.0
        %s232 = scalar_lea.vmem %s182, 4 [#allocation4]
        %v233 = vld [vmem:[%s232] sm:$0x3]
        %v234 = vsub.f32 %v233, %v226
        %v235 = vmul.f32 %v234, 1.442695
        %v236 = vpow.pop %v235
        %v237 = vadd.f32 %v231, %v236
        %s238 = scalar_lea.vmem %s182, 6 [#allocation4]
        %v239 = vld [vmem:[%s238] sm:$0x3]
        %v240 = vsub.f32 %v239, %v226
        %v241 = vmul.f32 %v240, 1.442695
        %v242 = vpow.pop %v241
        %v243 = vadd.f32 %v237, %v242
        %v244 = vrcp.pop %v243
        %v245 = vmul.f32 %v243, %v244
        %v246 = vsub.f32 2.0, %v245
        %v247 = vmul.f32 %v244, %v246
        %v248 = vld [vmem:[#allocation2] sm:$0x3]
        %v249 = vmul.f32 %v247, %v224
        %v250 = vadd.f32 %v248, %v249
        %251 = vst [vmem:[#allocation2] sm:$0x3] %v250
        %v252 = vld [vmem:[#allocation3] sm:$0x3]
        %v253 = vadd.f32 %v247, %v224
        %v254 = vadd.f32 %v252, %v253
        %255 = vst [vmem:[#allocation3] sm:$0x3] %v254
        // Predicated region
        $region41: #{tpu_custom_call.1} parent=27 // pred_check
          %p256 = pneg %p217
        $region42: #{tpu_custom_call.1} parent=27 // pred_check_branch
          %258 = sbr.rel (%p256) target = $region44
        $region43: #{tpu_custom_call.1} parent=27 // pred_region
          %v259 = vld [vmem:[#allocation2] sm:$0x3]
          %vm260 = vcmask 1041408
          %v261 = vsel %vm260, %v259, 0.0
          %262 = vadd.xlane.f32.xlu0 %v261
          %v263 = vpop.xlane.xlu0 %262
          %v264 = vrot.slane %v263, 4
          %v265 = vadd.f32 %v263, %v264
          %v266 = vrot.slane %v265, 2
          %v267 = vadd.f32 %v265, %v266
          %v268 = vrot.slane %v267, 1
          %v269 = vadd.f32 %v267, %v268
          %s270 = vtos %v269
          %v271 = vld [vmem:[#allocation3] sm:$0x3]
          %v272 = vsel %vm260, %v271, 0.0
          %273 = vadd.xlane.f32.xlu0 %v272
          %v274 = vpop.xlane.xlu0 %273
          %v275 = vrot.slane %v274, 4
          %v276 = vadd.f32 %v274, %v275
          %v277 = vrot.slane %v276, 2
          %v278 = vadd.f32 %v276, %v277
          %v279 = vrot.slane %v278, 1
          %v280 = vadd.f32 %v278, %v279
          %s281 = vtos %v280
          %s282 = smul.f32 %s270, 2.0
          %s283 = sadd.f32 %s282, 1e-05
          %s284 = sadd.f32 %s281, 1e-05
          %v285 = vstv %s284
          %v286 = vrcp.pop %v285
          %s287 = vtos %v286
          %s288 = smul.f32 %s283, %s287
          %s289 = ssub.f32 1.0, %s288
          %v290 = vstv %s289
          %291 = vst [vmem:[%s216] sm:$0xff] %v290
        $region44: #{tpu_custom_call.1} parent=27 // pred_fallthru
          _
        %s292 = sand.u32 %s98, 1
        %s293 = scalar_lea.sflag [#allocation6], %s292
        %s294 = sand.u32 %s98, 1
        %s295 = smul.addr %s294, 8
        %s296 = scalar_lea.vmem [#allocation9], %s295
        // Predicated region
        $region45: #{tpu_custom_call.1} parent=27 // pred_check
          %p297 = pneg %p108
        $region46: #{tpu_custom_call.1} parent=27 // pred_check_branch
          %299 = sbr.rel (%p297) target = $region48
        $region47: #{tpu_custom_call.1} parent=27 // pred_region
          %s301 = ssub.s32 128, 128
          %302 = vsyncadd %s293, %s301
          %s303 = smul.addr %s26, 128
          %s304 = scalar_lea.hbm %s2, %s303
          %s306 = sshll.u32 %s296, 4
          %s307 = int_to_ptr.vmem [resolvable:$true] %s306
          %309 = dma.vmem_to_hbm [thread:$0]  %s307, 128, %s304, %s293
        $region48: #{tpu_custom_call.1} parent=27 // pred_fallthru
          _
      $region28: #{tpu_custom_call.1} parent=5 // pred_fallthru
        _
      %p310 = scmp.le.s32.totalorder 2, %s17
      // Predicated region
      $region49: #{tpu_custom_call.1} parent=5 // pred_check
        %p311 = pneg %p310
      $region50: #{tpu_custom_call.1} parent=5 // pred_check_branch
        %313 = sbr.rel (%p311) target = $region52
      $region51: #{tpu_custom_call.1} parent=5 // pred_region
        %s314 = ssub.s32 %s17, 2
        // Predicated region
        $region53: #{tpu_custom_call.1} parent=51 // pred_check
          %p315 = pneg %p114
        $region54: #{tpu_custom_call.1} parent=51 // pred_check_branch
          %317 = sbr.rel (%p315) target = $region56
        $region55: #{tpu_custom_call.1} parent=51 // pred_region
          %s318 = sand.u32 %s99, 1
          %s319 = scalar_lea.sflag [#allocation6], %s318
          %s320 = sand.u32 %s99, 1
          %s321 = smul.addr %s320, 8
          %s322 = scalar_lea.vmem [#allocation9], %s321
          %323 = dma.done %s319, 128
        $region56: #{tpu_custom_call.1} parent=51 // pred_fallthru
          _
      $region52: #{tpu_custom_call.1} parent=5 // pred_fallthru
        _
    $region6: #{tpu_custom_call.1} parent=1 // loop_footer
      %s21 = sadd.s32 1, %s17
    $region7: #{tpu_custom_call.1} parent=1 // loop_footer_branch
      %16 = sbr.rel target = $region3
    $region8: #{tpu_custom_call.1} parent=1 // loop_exit
      _
    %324 = vsyncpa [#allocation5], 1
    %s325 = scalar_lea.sflag [#allocation5], 1
    %326 = vsyncpa %s325, 1
    %327 = vsyncpa [#allocation8], 1
    %s328 = scalar_lea.sflag [#allocation8], 1
    %329 = vsyncpa %s328, 1
    %330 = vsyncpa [#allocation6], 1
    %s331 = scalar_lea.sflag [#allocation6], 1
    %332 = vsyncpa %s331, 1

</llo_original>
